<compile_context>
chip_gen: v7x
topology: tpu7x:2x2x1
jax: 0.10.0
libtpu: 0.0.40
codegen_flags: <defaults>
</compile_context>

<pallas_src>
import math
import jax
import jax.numpy as jnp
from jax import lax
from jax.experimental import pallas as pl
from jax.experimental.pallas import tpu as pltpu

POOL = 6  # max_pool2d kernel == stride in the module


# ---------------------------------------------------------------------------
# Kernel 1: conv1 (im2col matmul) + GDN1 + 6x6 max pool
# ---------------------------------------------------------------------------
def _conv_gdn_pool_kernel(patches_ref, w1_ref, b1_ref, g1t_ref, beta1_ref,
                          out_ref, y_scratch):
    """One grid step = one batch sample x one band of 6 conv-output rows.

    patches_ref : (band, Kp) bf16   band = Wp*36 pixels, pool-window-grouped
    w1_ref      : (Kp, C1)   bf16   conv weight (im2col layout), K zero-padded
    b1_ref      : (1, C1)    f32
    g1t_ref     : (C1, C1)   f32    gamma1^T
    beta1_ref   : (1, C1)    f32
    out_ref     : (Wp, C1)   f32    pooled GDN activations for this band
    y_scratch   : (band, C1) f32
    """
    # conv1 as a single im2col matmul on the MXU (bf16 operands, f32 acc).
    conv = jnp.dot(patches_ref[...], w1_ref[...],
                   preferred_element_type=jnp.float32)
    conv = conv + b1_ref[...]

    # GDN1: y = x / sqrt(x^2 @ gamma1^T + beta1)   (channel-coupled, per pixel)
    norm = jnp.dot(conv * conv, g1t_ref[...],
                   preferred_element_type=jnp.float32) + beta1_ref[...]
    y_scratch[...] = conv * lax.rsqrt(norm)

    # 6x6 max pool (stride 6).  The wrapper pre-orders the band's rows as
    # (wp, i, j), so each pooling window is a contiguous block of 36 rows.
    n_windows = out_ref.shape[0]          # Wp
    win = POOL * POOL                     # 36
    pooled = [jnp.max(y_scratch[i * win:(i + 1) * win, :], axis=0, keepdims=True)
              for i in range(n_windows)]
    out_ref[...] = jnp.concatenate(pooled, axis=0)


# ---------------------------------------------------------------------------
# Kernel 2: fc1 (reduction-tiled dense) + GDN2 + fc2
# ---------------------------------------------------------------------------
def _fc_gdn_fc_kernel(flat_ref, wfc1_ref, bfc1_ref, g2t_ref, beta2_ref,
                      wfc2_ref, bfc2_ref, out_ref, acc_ref):
    """flat_ref (B, tf) f32; wfc1_ref (tf, 128); acc_ref (B, 128) f32 scratch."""
    f = pl.program_id(0)

    @pl.when(f == 0)
    def _():
        acc_ref[...] = jnp.zeros_like(acc_ref)

    acc_ref[...] += jnp.dot(flat_ref[...], wfc1_ref[...],
                            preferred_element_type=jnp.float32)

    @pl.when(f == pl.num_programs(0) - 1)
    def _():
        x1 = acc_ref[...] + bfc1_ref[...]                        # (B, 128)
        norm = jnp.dot(x1 * x1, g2t_ref[...],
                       preferred_element_type=jnp.float32) + beta2_ref[...]
        y2 = x1 * lax.rsqrt(norm)                                # GDN2
        s = jnp.sum(y2 * wfc2_ref[...], axis=-1, keepdims=True) + bfc2_ref[0]
        out_ref[...] = s                                         # (B, 1)


# ---------------------------------------------------------------------------
# Plain-JAX glue
# ---------------------------------------------------------------------------
def im2col_nchw(x, kh, kw, stride, pad):
    """NCHW -> (B, Ho*Wo, C*kh*kw) with K flattened in (c_in, kh, kw) order."""
    B, C, H, W = x.shape
    xp = jnp.pad(x, ((0, 0), (0, 0), (pad, pad), (pad, pad)))
    Ho = (H + 2 * pad - kh) // stride + 1
    Wo = (W + 2 * pad - kw) // stride + 1
    cols = []
    for i in range(kh):
        for j in range(kw):
            cols.append(xp[:, :, i:i + stride * Ho:stride, j:j + stride * Wo:stride])
    col = jnp.stack(cols, axis=2)                 # (B, C, kh*kw, Ho, Wo)
    col = col.reshape(B, C * kh * kw, Ho * Wo)
    return jnp.transpose(col, (0, 2, 1)), Ho, Wo  # (B, P, K)


def meon_wide_forward(x, conv_w, conv_b, gamma1, beta1,
                      fc1_w, fc1_b, gamma2, beta2, fc2_w, fc2_b,
                      *, stride=4, pad=4, tf=512):
    B, C_in, H, W = x.shape
    C1, _, KH, KW = conv_w.shape
    assert C1 % 128 == 0, "channel count must be lane-aligned (pad C1 if not)"

    # --- glue: im2col, pool-window row grouping, K zero-pad, bf16 cast -------
    patches, Ho, Wo = im2col_nchw(x, KH, KW, stride, pad)       # (B, P, K)
    K = C_in * KH * KW
    assert Ho % POOL == 0 and Wo % POOL == 0
    Hp, Wp = Ho // POOL, Wo // POOL
    # Rows -> (hp, wp, i, j): each 6x6 pool window becomes 36 contiguous rows.
    patches = patches.reshape(B, Hp, POOL, Wp, POOL, K)
    patches = patches.transpose(0, 1, 3, 2, 4, 5).reshape(B, Ho * Wo, K)
    Kp = max(256, ((K + 127) // 128) * 128)                     # lane-aligned K
    patches = jnp.pad(patches, ((0, 0), (0, 0), (0, Kp - K))).astype(jnp.bfloat16)
    w1 = jnp.pad(conv_w.reshape(C1, K).T,
                 ((0, Kp - K), (0, 0))).astype(jnp.bfloat16)    # (Kp, C1)

    band = Wp * POOL * POOL                                     # rows per step
    pooled = pl.pallas_call(
        _conv_gdn_pool_kernel,
        out_shape=jax.ShapeDtypeStruct((B, Hp, Wp, C1), jnp.float32),
        grid=(B, Hp),
        in_specs=[
            pl.BlockSpec((None, band, Kp), lambda b, r: (b, r, 0)),   # patches
            pl.BlockSpec((Kp, C1), lambda b, r: (0, 0)),              # conv w
            pl.BlockSpec((1, C1), lambda b, r: (0, 0)),               # conv b
            pl.BlockSpec((C1, C1), lambda b, r: (0, 0)),              # gamma1^T
            pl.BlockSpec((1, C1), lambda b, r: (0, 0)),               # beta1
        ],
        out_specs=pl.BlockSpec((None, None, Wp, C1), lambda b, r: (b, r, 0, 0)),
        scratch_shapes=[pltpu.VMEM((band, C1), jnp.float32)],
        compiler_params=pltpu.CompilerParams(
            dimension_semantics=("parallel", "parallel")),
    )(patches, w1, conv_b.reshape(1, C1), gamma1.T, beta1.reshape(1, C1))

    # --- glue: flatten in (hp, wp, c) order; reorder fc1 weight to match -----
    F_dim = Hp * Wp * C1
    flat = pooled.reshape(B, F_dim)                              # f32
    n_fc = fc1_w.shape[0]
    wfc1 = (fc1_w.reshape(n_fc, C1, Hp, Wp)      # torch flatten order (c,hp,wp)
                 .transpose(0, 2, 3, 1)          # -> (hp, wp, c)
                 .reshape(n_fc, F_dim).T)        # (F, 128)
    tf = tf if F_dim % tf == 0 else F_dim

    out = pl.pallas_call(
        _fc_gdn_fc_kernel,
        out_shape=jax.ShapeDtypeStruct((B, 1), jnp.float32),
        grid=(F_dim // tf,),
        in_specs=[
            pl.BlockSpec((B, tf), lambda f: (0, f)),                  # flat
            pl.BlockSpec((tf, n_fc), lambda f: (f, 0)),               # fc1 w
            pl.BlockSpec((1, n_fc), lambda f: (0, 0)),                # fc1 b
            pl.BlockSpec((n_fc, n_fc), lambda f: (0, 0)),             # gamma2^T
            pl.BlockSpec((1, n_fc), lambda f: (0, 0)),                # beta2
            pl.BlockSpec((1, n_fc), lambda f: (0, 0)),                # fc2 w
            pl.BlockSpec(memory_space=pltpu.MemorySpace.SMEM),        # fc2 b
        ],
        out_specs=pl.BlockSpec((B, 1), lambda f: (0, 0)),
        scratch_shapes=[pltpu.VMEM((B, n_fc), jnp.float32)],
        compiler_params=pltpu.CompilerParams(
            dimension_semantics=("arbitrary",)),
    )(flat, wfc1, fc1_b.reshape(1, n_fc), gamma2.T,
      beta2.reshape(1, n_fc), fc2_w.reshape(1, n_fc), fc2_b)
    return out


if __name__ == "__main__":
    # Scaled-down shapes with the module's structure:
    # 43x43 input -> conv (7x7, s4, p4) -> 12x12 map -> 6x6 pool -> 2x2
    # -> flatten C1*2*2 -> fc1 -> 128 -> gdn2 -> fc2 -> 1.
    B, C_IN, H, W = 2, 3, 43, 43
    C1 = 256                       # stand-in for the module's 2048 filters
    KH = KW = 7
    STRIDE, PAD = 4, 4
    N_FC = 128

    Ho = (H + 2 * PAD - KH) // STRIDE + 1
    Wo = (W + 2 * PAD - KW) // STRIDE + 1
    Hp, Wp = Ho // POOL, Wo // POOL
    F_dim = C1 * Hp * Wp

    key = jax.random.PRNGKey(0)
    ks = jax.random.split(key, 12)

    x = jax.random.normal(ks[0], (B, C_IN, H, W), jnp.float32)

    # Init mirroring the module (weights ~ N(0, sqrt(2/n))).  GDN params are
    # gamma=1 / beta=0.01 in the module init; perturb them (keeping them
    # positive) so the test exercises the full channel-coupled normalization.
    n1 = KH * KW * C1
    conv_w = jax.random.normal(ks[1], (C1, C_IN, KH, KW), jnp.float32) * math.sqrt(2.0 / n1)
    conv_b = jax.random.normal(ks[2], (C1,), jnp.float32) * 0.1
    gamma1 = 1.0 + 0.5 * jnp.abs(jax.random.normal(ks[3], (C1, C1), jnp.float32))
    beta1 = 0.01 + 0.5 * jnp.abs(jax.random.normal(ks[4], (C1,), jnp.float32))
    fc1_w = jax.random.normal(ks[5], (N_FC, F_dim, 1, 1), jnp.float32) * math.sqrt(2.0 / N_FC)
    fc1_b = jax.random.normal(ks[6], (N_FC,), jnp.float32) * 0.1
    gamma2 = 1.0 + 0.5 * jnp.abs(jax.random.normal(ks[7], (N_FC, N_FC), jnp.float32))
    beta2 = 0.01 + 0.5 * jnp.abs(jax.random.normal(ks[8], (N_FC,), jnp.float32))
    fc2_w = jax.random.normal(ks[9], (1, N_FC, 1, 1), jnp.float32) * math.sqrt(2.0)
    fc2_b = jax.random.normal(ks[10], (1,), jnp.float32) * 0.1

    y = meon_wide_forward(x, conv_w, conv_b, gamma1, beta1,
                          fc1_w, fc1_b, gamma2, beta2, fc2_w, fc2_b,
                          stride=STRIDE, pad=PAD)
    y = jax.block_until_ready(y)
    assert y.shape == (B, 1)

    # Pure-JAX f32 reference of the PyTorch forward.
    conv_out = lax.conv_general_dilated(
        x, conv_w, (STRIDE, STRIDE), ((PAD, PAD), (PAD, PAD)),
        dimension_numbers=("NCHW", "OIHW", "NCHW")) + conv_b[None, :, None, None]
    norm1 = jnp.einsum("cj,bjhw->bchw", gamma1, conv_out ** 2) + beta1[None, :, None, None]
    g1 = conv_out / jnp.sqrt(norm1)
    pooled_ref = g1.reshape(B, C1, Hp, POOL, Wp, POOL).max(axis=(3, 5))
    flat_ref = pooled_ref.reshape(B, F_dim)                    # (c, hp, wp) order
    x1 = flat_ref @ fc1_w.reshape(N_FC, F_dim).T + fc1_b
    norm2 = (x1 ** 2) @ gamma2.T + beta2
    y2 = x1 / jnp.sqrt(norm2)
    y_ref = y2 @ fc2_w.reshape(1, N_FC).T + fc2_b[None, :]

    assert jnp.allclose(y, y_ref, rtol=2e-2, atol=2e-2), (y, y_ref)
    print("KERNEL_OK")
</pallas_src>

<mosaic_0001>
module attributes {stable_mosaic.version = 11 : i64} {
  func.func @_conv_gdn_pool_kernel(%arg0: i32, %arg1: i32, %arg2: memref<1x72x256xbf16, #tpu.memory_space<vmem>>, %arg3: memref<256x256xbf16, #tpu.memory_space<vmem>>, %arg4: memref<1x256xf32, #tpu.memory_space<vmem>>, %arg5: memref<256x256xf32, #tpu.memory_space<vmem>>, %arg6: memref<1x256xf32, #tpu.memory_space<vmem>>, %arg7: memref<1x1x2x256xf32, #tpu.memory_space<vmem>>, %arg8: memref<72x256xf32, #tpu.memory_space<vmem>>) attributes {dimension_semantics = [#tpu.dimension_semantics<parallel>, #tpu.dimension_semantics<parallel>], iteration_bounds = array<i64: 2, 2>, scalar_prefetch = 0 : i64, scratch_operands = 1 : i64, tpu.core_type = #tpu.core_type<tc>, window_params = [{transform_indices = @transform_0, window_bounds = array<i64: 1, 72, 256>}, {pipeline_mode = #tpu.pipeline_mode<synchronous>, transform_indices = @transform_1, window_bounds = array<i64: 256, 256>}, {pipeline_mode = #tpu.pipeline_mode<synchronous>, transform_indices = @transform_2, window_bounds = array<i64: 1, 256>}, {pipeline_mode = #tpu.pipeline_mode<synchronous>, transform_indices = @transform_3, window_bounds = array<i64: 256, 256>}, {pipeline_mode = #tpu.pipeline_mode<synchronous>, transform_indices = @transform_4, window_bounds = array<i64: 1, 256>}, {transform_indices = @transform_5, window_bounds = array<i64: 1, 1, 2, 256>}]} {
    %c0 = arith.constant 0 : index
    %c0_0 = arith.constant 0 : index
    %c0_1 = arith.constant 0 : index
    %0 = vector.load %arg2[%c0, %c0_0, %c0_1] : memref<1x72x256xbf16, #tpu.memory_space<vmem>>, vector<1x72x256xbf16>
    %1 = vector.shape_cast %0 : vector<1x72x256xbf16> to vector<72x256xbf16>
    %c0_2 = arith.constant 0 : index
    %c0_3 = arith.constant 0 : index
    %2 = vector.load %arg3[%c0_2, %c0_3] : memref<256x256xbf16, #tpu.memory_space<vmem>>, vector<256x256xbf16>
    %cst = arith.constant dense<0.000000e+00> : vector<72x256xf32>
    %3 = tpu.matmul %1, %2, %cst {dimension_numbers = #tpu.dot_dimension_numbers<[1], [0], [0], [1], [0, 0, 1, 1], [], []>} : vector<72x256xbf16>, vector<256x256xbf16>, vector<72x256xf32> -> vector<72x256xf32>
    %c0_4 = arith.constant 0 : index
    %c0_5 = arith.constant 0 : index
    %4 = vector.load %arg4[%c0_4, %c0_5] : memref<1x256xf32, #tpu.memory_space<vmem>>, vector<1x256xf32>
    %5 = vector.broadcast %4 : vector<1x256xf32> to vector<72x256xf32>
    %6 = arith.addf %3, %5 : vector<72x256xf32>
    %7 = arith.mulf %6, %6 : vector<72x256xf32>
    %c0_6 = arith.constant 0 : index
    %c0_7 = arith.constant 0 : index
    %8 = vector.load %arg5[%c0_6, %c0_7] : memref<256x256xf32, #tpu.memory_space<vmem>>, vector<256x256xf32>
    %cst_8 = arith.constant dense<0.000000e+00> : vector<72x256xf32>
    %9 = tpu.matmul %7, %8, %cst_8 {dimension_numbers = #tpu.dot_dimension_numbers<[1], [0], [0], [1], [0, 0, 1, 1], [], []>} : vector<72x256xf32>, vector<256x256xf32>, vector<72x256xf32> -> vector<72x256xf32>
    %c0_9 = arith.constant 0 : index
    %c0_10 = arith.constant 0 : index
    %10 = vector.load %arg6[%c0_9, %c0_10] : memref<1x256xf32, #tpu.memory_space<vmem>>, vector<1x256xf32>
    %11 = vector.broadcast %10 : vector<1x256xf32> to vector<72x256xf32>
    %12 = arith.addf %9, %11 : vector<72x256xf32>
    %13 = math.rsqrt %12 : vector<72x256xf32>
    %14 = arith.mulf %6, %13 : vector<72x256xf32>
    %c0_11 = arith.constant 0 : index
    %c0_12 = arith.constant 0 : index
    %15 = vector.load %arg8[%c0_11, %c0_12] : memref<72x256xf32, #tpu.memory_space<vmem>>, vector<72x256xf32>
    tpu.vector_store %arg8[%c0_11, %c0_12], %14 {strides = array<i32>} : memref<72x256xf32, #tpu.memory_space<vmem>>, vector<72x256xf32>,
    %c0_13 = arith.constant 0 : index
    %c0_14 = arith.constant 0 : index
    %16 = vector.load %arg8[%c0_13, %c0_14] : memref<72x256xf32, #tpu.memory_space<vmem>>, vector<36x256xf32>
    %cst_15 = arith.constant dense<0xFF800000> : vector<256xf32>
    %17 = vector.multi_reduction <maximumf>, %16, %cst_15 [0] : vector<36x256xf32> to vector<256xf32>
    %18 = vector.shape_cast %17 : vector<256xf32> to vector<1x256xf32>
    %c36 = arith.constant 36 : index
    %c0_16 = arith.constant 0 : index
    %19 = vector.load %arg8[%c36, %c0_16] : memref<72x256xf32, #tpu.memory_space<vmem>>, vector<36x256xf32>
    %cst_17 = arith.constant dense<0xFF800000> : vector<256xf32>
    %20 = vector.multi_reduction <maximumf>, %19, %cst_17 [0] : vector<36x256xf32> to vector<256xf32>
    %21 = vector.shape_cast %20 : vector<256xf32> to vector<1x256xf32>
    %22 = tpu.concatenate %18, %21 in 0 : vector<1x256xf32>, vector<1x256xf32> -> vector<2x256xf32>
    %c0_18 = arith.constant 0 : index
    %c0_19 = arith.constant 0 : index
    %c0_20 = arith.constant 0 : index
    %c0_21 = arith.constant 0 : index
    %23 = vector.load %arg7[%c0_18, %c0_19, %c0_20, %c0_21] : memref<1x1x2x256xf32, #tpu.memory_space<vmem>>, vector<1x1x2x256xf32>
    %24 = vector.shape_cast %23 : vector<1x1x2x256xf32> to vector<2x256xf32>
    %25 = vector.shape_cast %22 : vector<2x256xf32> to vector<1x1x2x256xf32>
    tpu.vector_store %arg7[%c0_18, %c0_19, %c0_20, %c0_21], %25 {strides = array<i32>} : memref<1x1x2x256xf32, #tpu.memory_space<vmem>>, vector<1x1x2x256xf32>,
    return
  }
  func.func @transform_0(%arg0: i32, %arg1: i32) -> (i32, i32, i32) {
    %c0_i32 = arith.constant 0 : i32
    %c0_i32_0 = arith.constant 0 : i32
    return %arg0, %arg1, %c0_i32 : i32, i32, i32
  }
  func.func @transform_1(%arg0: i32, %arg1: i32) -> (i32, i32) {
    %c0_i32 = arith.constant 0 : i32
    %c0_i32_0 = arith.constant 0 : i32
    %c0_i32_1 = arith.constant 0 : i32
    return %c0_i32, %c0_i32_0 : i32, i32
  }
  func.func @transform_2(%arg0: i32, %arg1: i32) -> (i32, i32) {
    %c0_i32 = arith.constant 0 : i32
    %c0_i32_0 = arith.constant 0 : i32
    %c0_i32_1 = arith.constant 0 : i32
    return %c0_i32, %c0_i32_0 : i32, i32
  }
  func.func @transform_3(%arg0: i32, %arg1: i32) -> (i32, i32) {
    %c0_i32 = arith.constant 0 : i32
    %c0_i32_0 = arith.constant 0 : i32
    %c0_i32_1 = arith.constant 0 : i32
    return %c0_i32, %c0_i32_0 : i32, i32
  }
  func.func @transform_4(%arg0: i32, %arg1: i32) -> (i32, i32) {
    %c0_i32 = arith.constant 0 : i32
    %c0_i32_0 = arith.constant 0 : i32
    %c0_i32_1 = arith.constant 0 : i32
    return %c0_i32, %c0_i32_0 : i32, i32
  }
  func.func @transform_5(%arg0: i32, %arg1: i32) -> (i32, i32, i32, i32) {
    %c0_i32 = arith.constant 0 : i32
    %c0_i32_0 = arith.constant 0 : i32
    %c0_i32_1 = arith.constant 0 : i32
    return %arg0, %arg1, %c0_i32, %c0_i32_0 : i32, i32, i32, i32
  }
}

</mosaic_0001>

<llo_original>
// kernel: tpu_custom_call.1
$region0: #{tpu_custom_call.1}
  #allocation0 [shape = 'u32[]', space=smem, size = 0x4, offset = 0x4, fixed_abs, tag = 'smem constant byte address 0x4 - core index']
  #allocation1 [shape = 'u32[144,128]{1,0:T(1,128)}', space=vmem, size = 0x12000, scoped, tag = 'internal scratch']
  #allocation2 [shape = 'f32[72,256]{1,0:T(8,128)}', space=vmem, size = 0x12000, scoped, tag = 'scratch operand']
  %s0 = inlined_call_operand.hbm [shape: bf16[2,144,256], index: 0, kind: input, shape index: {}]
  %s1 = inlined_call_operand.hbm [shape: bf16[256,256], index: 1, kind: input, shape index: {}]
  %s2 = inlined_call_operand.vmem [shape: f32[1,256], index: 2, kind: input, shape index: {}]
  %s3 = inlined_call_operand.hbm [shape: f32[256,256], index: 3, kind: input, shape index: {}]
  %s4 = inlined_call_operand.vmem [shape: f32[1,256], index: 4, kind: input, shape index: {}]
  %s5 = inlined_call_operand.hbm [shape: f32[2,2,2,256], index: 5, kind: output, shape index: {}]
  %s6 = sld [smem:[#allocation0]]
  $region65: #{tpu_custom_call.1} parent=0
    _
  %s8 = ssub.s32 1, %s6
  %s9 = scalar_select 0, %s8, %s6
  $region1: #{tpu_custom_call.1} parent=0
    #allocation3 [shape = 'u8[73728]{0}', space=vmem, size = 0x12000, scoped, tag = 'input window, operand 0']
    #allocation4 [shape = 's32[2]{0}', space=sflag, size = 0x8, scoped, tag = 'scoped memory for tpu_custom_call.1']
    #allocation5 [shape = 's32[2]{0}', space=sflag, size = 0x8, scoped, tag = 'scoped memory for tpu_custom_call.1']
    #allocation6 [shape = 'u8[131072]{0}', space=vmem, size = 0x20000, scoped, tag = 'input window, operand 1, single buffered']
    #allocation7 [shape = 's32[1]{0}', space=sflag, size = 0x4, scoped, tag = 'scoped memory for tpu_custom_call.1']
    #allocation8 [shape = 'u8[262144]{0}', space=vmem, size = 0x40000, scoped, tag = 'input window, operand 3, single buffered']
    #allocation9 [shape = 'u8[4096]{0}', space=vmem, size = 0x1000, scoped, tag = 'output window, operand 0']
    %10 = vsyncpa [#allocation4], 0
    %s11 = scalar_lea.sflag [#allocation4], 1
    %12 = vsyncpa %s11, 0
    %13 = vsyncpa [#allocation7], 0
    %14 = vsyncpa [#allocation5], 0
    %s15 = scalar_lea.sflag [#allocation5], 1
    %16 = vsyncpa %s15, 0
    loop: start=0, step=1, limit=6
    $region2: #{tpu_custom_call.1} parent=1 // loop_pre_header
      _
    $region3: #{tpu_custom_call.1} parent=1 // loop_header
      %s18 = sphi 0, %s22
      %p19 = scmp.ge.s32.totalorder %s18, 6
      %s25 = sphi 0, %s37
      %s26 = sphi 0, %s33
      %s27 = sphi 0, %s25
      %s28 = sphi 0, %s26
      %s29 = sphi 0, %s27
      %s30 = sphi 0, %s28
      %s42 = sphi 0, %s44
      %s45 = sphi 0, %s42
      %s46 = sphi 0, %s45
      %s62 = sphi 0, %s46
      %s66 = sphi 0, %s66
      %s68 = sphi 0, %s66
      %s69 = sphi 0, %s68
      %s83 = sphi 0, %s69
      %s87 = sphi 0, %s87
      %s89 = sphi 0, %s87
      %s90 = sphi 0, %s89
      %s104 = sphi 0, %s90
      %s108 = sphi 0, %s108
      %s110 = sphi 0, %s108
      %s111 = sphi 0, %s110
      %s125 = sphi 0, %s111
      %s129 = sphi 0, %s129
      %s131 = sphi 0, %s129
      %s132 = sphi 0, %s131
      %s146 = sphi 0, %s132
      %s154 = sphi 0, %s156
      %s157 = sphi 0, %s154
      %s158 = sphi 0, %s157
      %s174 = sphi 0, %s158
    $region4: #{tpu_custom_call.1} parent=1 // loop_header_branch
      %21 = sbr.rel (%p19) target = $region8
    $region5: #{tpu_custom_call.1} parent=1 // loop_body
      %s23 = ssub.s32 %s18, 1
      %s24 = ssub.s32 %s18, 2
      %s31 = sadd.s32 1, %s26
      %p32 = scmp.ge.s32.totalorder %s31, 2
      %s33 = scalar_select %p32, 0, %s31
      %s34 = sadd.s32 1, %s25
      %s35 = scalar_select %p32, %s34, %s25
      %p36 = scmp.ge.s32.totalorder %s35, 2
      %s37 = scalar_select %p36, 0, %s35
      %s38 = ssub.s32 %s25, %s37
      %s39 = ssub.s32 %s26, %s33
      %s40 = sor.u32 %s38, %s39
      %p41 = scmp.eq.s32.totalorder %s40, 0
      %s43 = sadd.s32 %s42, 1
      %s44 = scalar_select %p41, %s42, %s43
      %p47 = pneg %p41
      %p48 = scmp.eq.s32.totalorder %s18, 3
      %p49 = por %p47, %p48
      %p50 = scmp.ne.s32.totalorder %s42, %s45
      %p51 = scmp.eq.s32.totalorder %s18, 0
      %p52 = por %p50, %p51
      %p53 = scmp.ne.s32.totalorder %s42, %s45
      %p54 = scmp.eq.s32.totalorder %s23, 3
      %p55 = por %p53, %p54
      %p56 = scmp.ne.s32.totalorder %s45, %s46
      %p57 = scmp.eq.s32.totalorder %s23, 0
      %p58 = por %p56, %p57
      %p59 = scmp.ne.s32.totalorder %s45, %s46
      %p60 = scmp.eq.s32.totalorder %s24, 3
      %p61 = por %p59, %p60
      %p63 = scmp.ne.s32.totalorder %s46, %s62
      %p64 = scmp.eq.s32.totalorder %s24, 0
      %p65 = por %p63, %p64
      %s67 = sadd.s32 %s66, 1
      %p70 = scmp.eq.s32.totalorder %s18, 3
      %p71 = scmp.ne.s32.totalorder %s66, %s68
      %p72 = scmp.eq.s32.totalorder %s18, 0
      %p73 = por %p71, %p72
      %p74 = scmp.ne.s32.totalorder %s66, %s68
      %p75 = scmp.eq.s32.totalorder %s23, 3
      %p76 = por %p74, %p75
      %p77 = scmp.ne.s32.totalorder %s68, %s69
      %p78 = scmp.eq.s32.totalorder %s23, 0
      %p79 = por %p77, %p78
      %p80 = scmp.ne.s32.totalorder %s68, %s69
      %p81 = scmp.eq.s32.totalorder %s24, 3
      %p82 = por %p80, %p81
      %p84 = scmp.ne.s32.totalorder %s69, %s83
      %p85 = scmp.eq.s32.totalorder %s24, 0
      %p86 = por %p84, %p85
      %s88 = sadd.s32 %s87, 1
      %p91 = scmp.eq.s32.totalorder %s18, 3
      %p92 = scmp.ne.s32.totalorder %s87, %s89
      %p93 = scmp.eq.s32.totalorder %s18, 0
      %p94 = por %p92, %p93
      %p95 = scmp.ne.s32.totalorder %s87, %s89
      %p96 = scmp.eq.s32.totalorder %s23, 3
      %p97 = por %p95, %p96
      %p98 = scmp.ne.s32.totalorder %s89, %s90
      %p99 = scmp.eq.s32.totalorder %s23, 0
      %p100 = por %p98, %p99
      %p101 = scmp.ne.s32.totalorder %s89, %s90
      %p102 = scmp.eq.s32.totalorder %s24, 3
      %p103 = por %p101, %p102
      %p105 = scmp.ne.s32.totalorder %s90, %s104
      %p106 = scmp.eq.s32.totalorder %s24, 0
      %p107 = por %p105, %p106
      %s109 = sadd.s32 %s108, 1
      %p112 = scmp.eq.s32.totalorder %s18, 3
      %p113 = scmp.ne.s32.totalorder %s108, %s110
      %p114 = scmp.eq.s32.totalorder %s18, 0
      %p115 = por %p113, %p114
      %p116 = scmp.ne.s32.totalorder %s108, %s110
      %p117 = scmp.eq.s32.totalorder %s23, 3
      %p118 = por %p116, %p117
      %p119 = scmp.ne.s32.totalorder %s110, %s111
      %p120 = scmp.eq.s32.totalorder %s23, 0
      %p121 = por %p119, %p120
      %p122 = scmp.ne.s32.totalorder %s110, %s111
      %p123 = scmp.eq.s32.totalorder %s24, 3
      %p124 = por %p122, %p123
      %p126 = scmp.ne.s32.totalorder %s111, %s125
      %p127 = scmp.eq.s32.totalorder %s24, 0
      %p128 = por %p126, %p127
      %s130 = sadd.s32 %s129, 1
      %p133 = scmp.eq.s32.totalorder %s18, 3
      %p134 = scmp.ne.s32.totalorder %s129, %s131
      %p135 = scmp.eq.s32.totalorder %s18, 0
      %p136 = por %p134, %p135
      %p137 = scmp.ne.s32.totalorder %s129, %s131
      %p138 = scmp.eq.s32.totalorder %s23, 3
      %p139 = por %p137, %p138
      %p140 = scmp.ne.s32.totalorder %s131, %s132
      %p141 = scmp.eq.s32.totalorder %s23, 0
      %p142 = por %p140, %p141
      %p143 = scmp.ne.s32.totalorder %s131, %s132
      %p144 = scmp.eq.s32.totalorder %s24, 3
      %p145 = por %p143, %p144
      %p147 = scmp.ne.s32.totalorder %s132, %s146
      %p148 = scmp.eq.s32.totalorder %s24, 0
      %p149 = por %p147, %p148
      %s150 = ssub.s32 %s25, %s37
      %s151 = ssub.s32 %s26, %s33
      %s152 = sor.u32 %s150, %s151
      %p153 = scmp.eq.s32.totalorder %s152, 0
      %s155 = sadd.s32 %s154, 1
      %s156 = scalar_select %p153, %s154, %s155
      %p159 = pneg %p153
      %p160 = scmp.eq.s32.totalorder %s18, 3
      %p161 = por %p159, %p160
      %p162 = scmp.ne.s32.totalorder %s154, %s157
      %p163 = scmp.eq.s32.totalorder %s18, 0
      %p164 = por %p162, %p163
      %p165 = scmp.ne.s32.totalorder %s154, %s157
      %p166 = scmp.eq.s32.totalorder %s23, 3
      %p167 = por %p165, %p166
      %p168 = scmp.ne.s32.totalorder %s157, %s158
      %p169 = scmp.eq.s32.totalorder %s23, 0
      %p170 = por %p168, %p169
      %p171 = scmp.ne.s32.totalorder %s157, %s158
      %p172 = scmp.eq.s32.totalorder %s24, 3
      %p173 = por %p171, %p172
      %p175 = scmp.ne.s32.totalorder %s158, %s174
      %p176 = scmp.eq.s32.totalorder %s24, 0
      %p177 = por %p175, %p176
      %p178 = scmp.le.s32.totalorder 1, %s18
      %p179 = scmp.lt.s32.totalorder %s18, 5
      %p180 = pnand %p178, %p179
      %p181 = pneg %p180
      // Predicated region
      $region9: #{tpu_custom_call.1} parent=5 // pred_check
        _
      $region10: #{tpu_custom_call.1} parent=5 // pred_check_branch
        %183 = sbr.rel (%p180) target = $region12
      $region11: #{tpu_custom_call.1} parent=5 // pred_region
        %s184 = ssub.s32 %s18, 1
        // Predicated region
        $region13: #{tpu_custom_call.1} parent=11 // pred_check
          %p185 = pneg %p79
        $region14: #{tpu_custom_call.1} parent=11 // pred_check_branch
          %187 = sbr.rel (%p185) target = $region16
        $region15: #{tpu_custom_call.1} parent=11 // pred_region
          %s189 = ssub.s32 4096, 4096
          %190 = vsyncadd [#allocation7], %s189
          %s191 = sshll.u32 [#allocation6], 4
          %s192 = int_to_ptr.vmem [resolvable:$true] %s191
          %197 = dma.hbm_to_vmem [thread:$0]  %s1, 4096, %s192, [#allocation7], 128, 128, 8
        $region16: #{tpu_custom_call.1} parent=11 // pred_fallthru
          _
        // Predicated region
        $region17: #{tpu_custom_call.1} parent=11 // pred_check
          %p198 = pneg %p100
        $region18: #{tpu_custom_call.1} parent=11 // pred_check_branch
          %200 = sbr.rel (%p198) target = $region20
        $region19: #{tpu_custom_call.1} parent=11 // pred_region
          _
        $region20: #{tpu_custom_call.1} parent=11 // pred_fallthru
          _
        // Predicated region
        $region21: #{tpu_custom_call.1} parent=11 // pred_check
          %p201 = pneg %p121
        $region22: #{tpu_custom_call.1} parent=11 // pred_check_branch
          %203 = sbr.rel (%p201) target = $region24
        $region23: #{tpu_custom_call.1} parent=11 // pred_region
          %s205 = ssub.s32 8192, 8192
          %206 = vsyncadd [#allocation7], %s205
          %s207 = sshll.u32 [#allocation8], 4
          %s208 = int_to_ptr.vmem [resolvable:$true] %s207
          %213 = dma.hbm_to_vmem [thread:$0]  %s3, 8192, %s208, [#allocation7], 256, 256, 16
        $region24: #{tpu_custom_call.1} parent=11 // pred_fallthru
          _
        // Predicated region
        $region25: #{tpu_custom_call.1} parent=11 // pred_check
          %p214 = pneg %p142
        $region26: #{tpu_custom_call.1} parent=11 // pred_check_branch
          %216 = sbr.rel (%p214) target = $region28
        $region27: #{tpu_custom_call.1} parent=11 // pred_region
          _
        $region28: #{tpu_custom_call.1} parent=11 // pred_fallthru
          _
      $region12: #{tpu_custom_call.1} parent=5 // pred_fallthru
        _
      %p217 = scmp.lt.s32.totalorder %s18, 4
      // Predicated region
      $region29: #{tpu_custom_call.1} parent=5 // pred_check
        %p218 = pneg %p217
      $region30: #{tpu_custom_call.1} parent=5 // pred_check_branch
        %220 = sbr.rel (%p218) target = $region32
      $region31: #{tpu_custom_call.1} parent=5 // pred_region
        // Predicated region
        $region33: #{tpu_custom_call.1} parent=31 // pred_check
          %p221 = pneg %p52
        $region34: #{tpu_custom_call.1} parent=31 // pred_check_branch
          %223 = sbr.rel (%p221) target = $region36
        $region35: #{tpu_custom_call.1} parent=31 // pred_region
          %s224 = sand.u32 %s42, 1
          %s225 = scalar_lea.sflag [#allocation4], %s224
          %s226 = sand.u32 %s42, 1
          %s227 = smul.addr %s226, 72
          %s228 = scalar_lea.vmem [#allocation3], %s227
          %s229 = smul.u32 9, %s26
          %s231 = ssub.s32 1152, 1152
          %232 = vsyncadd %s225, %s231
          %s233 = smul.addr %s229, 2
          %s234 = smul.addr %s25, 36
          %s235 = sadd.s32 %s233, %s234
          %s236 = smul.addr %s235, 64
          %s237 = scalar_lea.hbm %s0, %s236
          %s238 = sshll.u32 %s228, 4
          %s239 = int_to_ptr.vmem [resolvable:$true] %s238
          %244 = dma.hbm_to_vmem [thread:$0]  %s237, 1152, %s239, %s225, 128, 128, 8
        $region36: #{tpu_custom_call.1} parent=31 // pred_fallthru
          _
      $region32: #{tpu_custom_call.1} parent=5 // pred_fallthru
        _
      %p245 = scmp.le.s32.totalorder 1, %s18
      %p246 = scmp.lt.s32.totalorder %s18, 5
      %p247 = pnand %p245, %p246
      %p248 = pneg %p247
      // Predicated region
      $region37: #{tpu_custom_call.1} parent=5 // pred_check
        _
      $region38: #{tpu_custom_call.1} parent=5 // pred_check_branch
        %250 = sbr.rel (%p247) target = $region40
      $region39: #{tpu_custom_call.1} parent=5 // pred_region
        %s251 = ssub.s32 %s18, 1
        %s252 = sand.u32 %s45, 1
        %s253 = scalar_lea.sflag [#allocation4], %s252
        %s254 = sand.u32 %s45, 1
        %s255 = smul.addr %s254, 72
        %s256 = scalar_lea.vmem [#allocation3], %s255
        // Predicated region
        $region41: #{tpu_custom_call.1} parent=39 // pred_check
          %p257 = pneg %p58
        $region42: #{tpu_custom_call.1} parent=39 // pred_check_branch
          %259 = sbr.rel (%p257) target = $region44
        $region43: #{tpu_custom_call.1} parent=39 // pred_region
          %260 = dma.done %s253, 1152
        $region44: #{tpu_custom_call.1} parent=39 // pred_fallthru
          _
        // Predicated region
        $region45: #{tpu_custom_call.1} parent=39 // pred_check
          %p261 = pneg %p79
        $region46: #{tpu_custom_call.1} parent=39 // pred_check_branch
          %263 = sbr.rel (%p261) target = $region48
        $region47: #{tpu_custom_call.1} parent=39 // pred_region
          %264 = dma.done [#allocation7], 4096
        $region48: #{tpu_custom_call.1} parent=39 // pred_fallthru
          _
        // Predicated region
        $region49: #{tpu_custom_call.1} parent=39 // pred_check
          %p265 = pneg %p121
        $region50: #{tpu_custom_call.1} parent=39 // pred_check_branch
          %267 = sbr.rel (%p265) target = $region52
        $region51: #{tpu_custom_call.1} parent=39 // pred_region
          %268 = dma.done [#allocation7], 8192
        $region52: #{tpu_custom_call.1} parent=39 // pred_fallthru
          _
        %s269 = sand.u32 %s45, 1
        %s270 = scalar_lea.sflag [#allocation4], %s269
        %s271 = sand.u32 %s45, 1
        %s272 = smul.addr %s271, 72
        %s273 = scalar_lea.vmem [#allocation3], %s272
        %p274 = pneg %p58
        %p275 = pneg %p55
        %p276 = pneg %p79
        %p277 = pneg %p76
        %p278 = pneg %p100
        %p279 = pneg %p97
        %p280 = pneg %p121
        %p281 = pneg %p118
        %p282 = pneg %p142
        %p283 = pneg %p139
        %p284 = pneg %p170
        %p285 = pneg %p167
        %s286 = sand.u32 %s157, 1
        %s287 = scalar_lea.sflag [#allocation5], %s286
        %s288 = sand.u32 %s157, 1
        %s289 = smul.addr %s288, 4
        %s290 = scalar_lea.vmem [#allocation9], %s289
        %s291 = smul.u32 9, %s28
        %v292 = vld [vmem:[%s256] sm:$0xff]
        %v293 = vld [vmem:[%s256 + $0x8] sm:$0xff]
        %v294 = vld [vmem:[%s256 + $0x10] sm:$0xff]
        %v295 = vld [vmem:[%s256 + $0x18] sm:$0xff]
        %v296 = vld [vmem:[%s256 + $0x20] sm:$0xff]
        %v297 = vld [vmem:[%s256 + $0x28] sm:$0xff]
        %v298 = vld [vmem:[%s256 + $0x30] sm:$0xff]
        %v299 = vld [vmem:[%s256 + $0x38] sm:$0xff]
        %v300 = vld [vmem:[%s256 + $0x40] sm:$0xff]
        %v301 = vld [vmem:[#allocation6] sm:$0xff]
        %v302 = vld [vmem:[#allocation6 + $0x8] sm:$0xff]
        %v303 = vld [vmem:[#allocation6 + $0x10] sm:$0xff]
        %v304 = vld [vmem:[#allocation6 + $0x18] sm:$0xff]
        %v305 = vld [vmem:[#allocation6 + $0x20] sm:$0xff]
        %v306 = vld [vmem:[#allocation6 + $0x28] sm:$0xff]
        %v307 = vld [vmem:[#allocation6 + $0x30] sm:$0xff]
        %v308 = vld [vmem:[#allocation6 + $0x38] sm:$0xff]
        %v309 = vld [vmem:[#allocation6 + $0x40] sm:$0xff]
        %v310 = vld [vmem:[#allocation6 + $0x48] sm:$0xff]
        %v311 = vld [vmem:[#allocation6 + $0x50] sm:$0xff]
        %v312 = vld [vmem:[#allocation6 + $0x58] sm:$0xff]
        %v313 = vld [vmem:[#allocation6 + $0x60] sm:$0xff]
        %v314 = vld [vmem:[#allocation6 + $0x68] sm:$0xff]
        %v315 = vld [vmem:[#allocation6 + $0x70] sm:$0xff]
        %v316 = vld [vmem:[#allocation6 + $0x78] sm:$0xff]
        %v317 = vld [vmem:[#allocation6 + $0x80] sm:$0xff]
        %v318 = vld [vmem:[#allocation6 + $0x88] sm:$0xff]
        %v319 = vld [vmem:[#allocation6 + $0x90] sm:$0xff]
        %v320 = vld [vmem:[#allocation6 + $0x98] sm:$0xff]
        %v321 = vld [vmem:[#allocation6 + $0xa0] sm:$0xff]
        %v322 = vld [vmem:[#allocation6 + $0xa8] sm:$0xff]
        %v323 = vld [vmem:[#allocation6 + $0xb0] sm:$0xff]
        %v324 = vld [vmem:[#allocation6 + $0xb8] sm:$0xff]
        %v325 = vld [vmem:[#allocation6 + $0xc0] sm:$0xff]
        %v326 = vld [vmem:[#allocation6 + $0xc8] sm:$0xff]
        %v327 = vld [vmem:[#allocation6 + $0xd0] sm:$0xff]
        %v328 = vld [vmem:[#allocation6 + $0xd8] sm:$0xff]
        %v329 = vld [vmem:[#allocation6 + $0xe0] sm:$0xff]
        %v330 = vld [vmem:[#allocation6 + $0xe8] sm:$0xff]
        %v331 = vld [vmem:[#allocation6 + $0xf0] sm:$0xff]
        %v332 = vld [vmem:[#allocation6 + $0xf8] sm:$0xff]
        %v333 = vld [vmem:[%s2] sm:$0x3]
        %v335 = vlaneseq
        %v336 = vshrl.u32 %v335, 7
        %v337 = vsub.s32 0, %v336
        %v338 = vrot.slane %v333, %v337
        %v339 = vlaneseq
        %v340 = vshrl.u32 %v339, 7
        %v341 = vsub.s32 1, %v340
        %v342 = vrot.slane %v333, %v341
        %v354 = vunpack.c.l.b16 %v292
        %v355 = vunpack.c.h.b16 %v292
        %v356 = vunpack.c.l.b16 %v293
        %v357 = vunpack.c.h.b16 %v293
        %v358 = vunpack.c.l.b16 %v294
        %v359 = vunpack.c.h.b16 %v294
        %v360 = vunpack.c.l.b16 %v295
        %v361 = vunpack.c.h.b16 %v295
        %v362 = vunpack.c.l.b16 %v296
        %v363 = vunpack.c.h.b16 %v296
        %v364 = vunpack.c.l.b16 %v297
        %v365 = vunpack.c.h.b16 %v297
        %v366 = vunpack.c.l.b16 %v298
        %v367 = vunpack.c.h.b16 %v298
        %v368 = vunpack.c.l.b16 %v299
        %v369 = vunpack.c.h.b16 %v299
        %v370 = vunpack.c.l.b16 %v300
        %v371 = vunpack.c.h.b16 %v300
        %v372 = vpack.c.b16 %v356, %v354
        %v373 = vpack.c.b16 %v357, %v355
        %v374 = vpack.c.b16 %v360, %v358
        %v375 = vpack.c.b16 %v361, %v359
        %v376 = vpack.c.b16 %v364, %v362
        %v377 = vpack.c.b16 %v365, %v363
        %v378 = vpack.c.b16 %v368, %v366
        %v379 = vpack.c.b16 %v369, %v367
        %v380 = vpack.c.b16 %v370, %v370
        %v381 = vpack.c.b16 %v371, %v371
        %v424 = vunpack.c.l.b16 %v301
        %v425 = vunpack.c.h.b16 %v301
        %v426 = vunpack.c.l.b16 %v302
        %v427 = vunpack.c.h.b16 %v302
        %v428 = vunpack.c.l.b16 %v303
        %v429 = vunpack.c.h.b16 %v303
        %v430 = vunpack.c.l.b16 %v304
        %v431 = vunpack.c.h.b16 %v304
        %v432 = vunpack.c.l.b16 %v305
        %v433 = vunpack.c.h.b16 %v305
        %v434 = vunpack.c.l.b16 %v306
        %v435 = vunpack.c.h.b16 %v306
        %v436 = vunpack.c.l.b16 %v307
        %v437 = vunpack.c.h.b16 %v307
        %v438 = vunpack.c.l.b16 %v308
        %v439 = vunpack.c.h.b16 %v308
        %v440 = vunpack.c.l.b16 %v309
        %v441 = vunpack.c.h.b16 %v309
        %v442 = vunpack.c.l.b16 %v310
        %v443 = vunpack.c.h.b16 %v310
        %v444 = vunpack.c.l.b16 %v311
        %v445 = vunpack.c.h.b16 %v311
        %v446 = vunpack.c.l.b16 %v312
        %v447 = vunpack.c.h.b16 %v312
        %v448 = vunpack.c.l.b16 %v313
        %v449 = vunpack.c.h.b16 %v313
        %v450 = vunpack.c.l.b16 %v314
        %v451 = vunpack.c.h.b16 %v314
        %v452 = vunpack.c.l.b16 %v315
        %v453 = vunpack.c.h.b16 %v315
        %v454 = vunpack.c.l.b16 %v316
        %v455 = vunpack.c.h.b16 %v316
        %v456 = vunpack.c.l.b16 %v317
        %v457 = vunpack.c.h.b16 %v317
        %v458 = vunpack.c.l.b16 %v318
        %v459 = vunpack.c.h.b16 %v318
        %v460 = vunpack.c.l.b16 %v319
        %v461 = vunpack.c.h.b16 %v319
        %v462 = vunpack.c.l.b16 %v320
        %v463 = vunpack.c.h.b16 %v320
        %v464 = vunpack.c.l.b16 %v321
        %v465 = vunpack.c.h.b16 %v321
        %v466 = vunpack.c.l.b16 %v322
        %v467 = vunpack.c.h.b16 %v322
        %v468 = vunpack.c.l.b16 %v323
        %v469 = vunpack.c.h.b16 %v323
        %v470 = vunpack.c.l.b16 %v324
        %v471 = vunpack.c.h.b16 %v324
        %v472 = vunpack.c.l.b16 %v325
        %v473 = vunpack.c.h.b16 %v325
        %v474 = vunpack.c.l.b16 %v326
        %v475 = vunpack.c.h.b16 %v326
        %v476 = vunpack.c.l.b16 %v327
        %v477 = vunpack.c.h.b16 %v327
        %v478 = vunpack.c.l.b16 %v328
        %v479 = vunpack.c.h.b16 %v328
        %v480 = vunpack.c.l.b16 %v329
        %v481 = vunpack.c.h.b16 %v329
        %v482 = vunpack.c.l.b16 %v330
        %v483 = vunpack.c.h.b16 %v330
        %v484 = vunpack.c.l.b16 %v331
        %v485 = vunpack.c.h.b16 %v331
        %v486 = vunpack.c.l.b16 %v332
        %v487 = vunpack.c.h.b16 %v332
        %v488 = vpack.c.b16 %v426, %v424
        %v489 = vpack.c.b16 %v427, %v425
        %v490 = vpack.c.b16 %v430, %v428
        %v491 = vpack.c.b16 %v431, %v429
        %v492 = vpack.c.b16 %v434, %v432
        %v493 = vpack.c.b16 %v435, %v433
        %v494 = vpack.c.b16 %v438, %v436
        %v495 = vpack.c.b16 %v439, %v437
        %v496 = vpack.c.b16 %v442, %v440
        %v497 = vpack.c.b16 %v443, %v441
        %v498 = vpack.c.b16 %v446, %v444
        %v499 = vpack.c.b16 %v447, %v445
        %v500 = vpack.c.b16 %v450, %v448
        %v501 = vpack.c.b16 %v451, %v449
        %v502 = vpack.c.b16 %v454, %v452
        %v503 = vpack.c.b16 %v455, %v453
        %v504 = vpack.c.b16 %v458, %v456
        %v505 = vpack.c.b16 %v459, %v457
        %v506 = vpack.c.b16 %v462, %v460
        %v507 = vpack.c.b16 %v463, %v461
        %v508 = vpack.c.b16 %v466, %v464
        %v509 = vpack.c.b16 %v467, %v465
        %v510 = vpack.c.b16 %v470, %v468
        %v511 = vpack.c.b16 %v471, %v469
        %v512 = vpack.c.b16 %v474, %v472
        %v513 = vpack.c.b16 %v475, %v473
        %v514 = vpack.c.b16 %v478, %v476
        %v515 = vpack.c.b16 %v479, %v477
        %v516 = vpack.c.b16 %v482, %v480
        %v517 = vpack.c.b16 %v483, %v481
        %v518 = vpack.c.b16 %v486, %v484
        %v519 = vpack.c.b16 %v487, %v485
        %552 = vmatprep.subr.bf16.mxu0 %v489
        %553 = vmatpush1.bf16.msra.mxu0 %v488
        %554 = vmatprep.subr.bf16.mxu0 %v491
        %555 = vmatpush1.bf16.msra.mxu0 %v490
        %556 = vmatprep.subr.bf16.mxu0 %v493
        %557 = vmatpush1.bf16.msra.mxu0 %v492
        %558 = vmatprep.subr.bf16.mxu0 %v495
        %559 = vmatpush1.bf16.msra.mxu0 %v494
        %560 = vmatprep.subr.bf16.mxu0 %v497
        %561 = vmatpush1.bf16.msra.mxu0 %v496
        %562 = vmatprep.subr.bf16.mxu0 %v499
        %563 = vmatpush1.bf16.msra.mxu0 %v498
        %564 = vmatprep.subr.bf16.mxu0 %v501
        %565 = vmatpush1.bf16.msra.mxu0 %v500
        %566 = vmatprep.subr.bf16.mxu0 %v503
        %567 = vmatpush1.bf16.msra.mxu0 %v502
        %568 = vmatprep.subr.bf16.mxu0 %v505
        %569 = vmatpush1.bf16.msra.mxu0 %v504
        %570 = vmatprep.subr.bf16.mxu0 %v507
        %571 = vmatpush1.bf16.msra.mxu0 %v506
        %572 = vmatprep.subr.bf16.mxu0 %v509
        %573 = vmatpush1.bf16.msra.mxu0 %v508
        %574 = vmatprep.subr.bf16.mxu0 %v511
        %575 = vmatpush1.bf16.msra.mxu0 %v510
        %576 = vmatprep.subr.bf16.mxu0 %v513
        %577 = vmatpush1.bf16.msra.mxu0 %v512
        %578 = vmatprep.subr.bf16.mxu0 %v515
        %579 = vmatpush1.bf16.msra.mxu0 %v514
        %580 = vmatprep.subr.bf16.mxu0 %v517
        %581 = vmatpush1.bf16.msra.mxu0 %v516
        %582 = vmatprep.subr.bf16.mxu0 %v519
        %583 = vmatpush1.bf16.msra.mxu0 %v518
        %584 = vmatprep.mubr.bf16.mxu0 %v373
        %585 = vmatmul.mubr.bf16.gmra.mrb[0].mxu0 %v372
        %v586 = vpop.f32.mrb[0].mxu0
        %v587 = vadd.f32 %v338, %v586
        %v588 = vpop.f32.mrb[0].mxu0
        %v589 = vadd.f32 %v342, %v588
        %v590 = vpop.f32.mrb[0].mxu0
        %v591 = vadd.f32 %v338, %v590
        %v592 = vpop.f32.mrb[0].mxu0
        %v593 = vadd.f32 %v342, %v592
        %594 = vmatprep.mubr.bf16.mxu0 %v375
        %595 = vmatmul.mubr.bf16.gmra.mrb[0].mxu0 %v374
        %v596 = vpop.f32.mrb[0].mxu0
        %v597 = vadd.f32 %v338, %v596
        %v598 = vpop.f32.mrb[0].mxu0
        %v599 = vadd.f32 %v342, %v598
        %v600 = vpop.f32.mrb[0].mxu0
        %v601 = vadd.f32 %v338, %v600
        %v602 = vpop.f32.mrb[0].mxu0
        %v603 = vadd.f32 %v342, %v602
        %604 = vmatprep.mubr.bf16.mxu0 %v377
        %605 = vmatmul.mubr.bf16.gmra.mrb[0].mxu0 %v376
        %v606 = vpop.f32.mrb[0].mxu0
        %v607 = vadd.f32 %v338, %v606
        %v608 = vpop.f32.mrb[0].mxu0
        %v609 = vadd.f32 %v342, %v608
        %v610 = vpop.f32.mrb[0].mxu0
        %v611 = vadd.f32 %v338, %v610
        %v612 = vpop.f32.mrb[0].mxu0
        %v613 = vadd.f32 %v342, %v612
        %614 = vmatprep.mubr.bf16.mxu0 %v379
        %615 = vmatmul.mubr.bf16.gmra.mrb[0].mxu0 %v378
        %v616 = vpop.f32.mrb[0].mxu0
        %v617 = vadd.f32 %v338, %v616
        %v618 = vpop.f32.mrb[0].mxu0
        %v619 = vadd.f32 %v342, %v618
        %v620 = vpop.f32.mrb[0].mxu0
        %v621 = vadd.f32 %v338, %v620
        %v622 = vpop.f32.mrb[0].mxu0
        %v623 = vadd.f32 %v342, %v622
        %624 = vmatprep.mubr.bf16.mxu0 %v381
        %625 = vmatmul.mubr.bf16.gmra.mrb[0].mxu0 %v380
        %v626 = vpop.f32.mrb[0].mxu0
        %v627 = vadd.f32 %v338, %v626
        %v628 = vpop.f32.mrb[0].mxu0
        %v629 = vadd.f32 %v342, %v628
        %v630 = vpop.f32.mrb[0].mxu0
        %v631 = vpop.f32.mrb[0].mxu0
        %632 = vdwg.mxu0
        %v633 = vmul.f32 %v587, %v587
        %v634 = vmul.f32 %v589, %v589
        %v635 = vmul.f32 %v591, %v591
        %v636 = vmul.f32 %v593, %v593
        %v637 = vmul.f32 %v597, %v597
        %v638 = vmul.f32 %v599, %v599
        %v639 = vmul.f32 %v601, %v601
        %v640 = vmul.f32 %v603, %v603
        %v641 = vmul.f32 %v607, %v607
        %v642 = vmul.f32 %v609, %v609
        %v643 = vmul.f32 %v611, %v611
        %v644 = vmul.f32 %v613, %v613
        %v645 = vmul.f32 %v617, %v617
        %v646 = vmul.f32 %v619, %v619
        %v647 = vmul.f32 %v621, %v621
        %v648 = vmul.f32 %v623, %v623
        %v649 = vmul.f32 %v627, %v627
        %v650 = vmul.f32 %v629, %v629
        %v651 = vld [vmem:[#allocation8] sm:$0xff]
        %v652 = vld [vmem:[#allocation8 + $0x8] sm:$0xff]
        %v653 = vld [vmem:[#allocation8 + $0x10] sm:$0xff]
        %v654 = vld [vmem:[#allocation8 + $0x18] sm:$0xff]
        %v655 = vld [vmem:[#allocation8 + $0x20] sm:$0xff]
        %v656 = vld [vmem:[#allocation8 + $0x28] sm:$0xff]
        %v657 = vld [vmem:[#allocation8 + $0x30] sm:$0xff]
        %v658 = vld [vmem:[#allocation8 + $0x38] sm:$0xff]
        %v659 = vld [vmem:[#allocation8 + $0x40] sm:$0xff]
        %v660 = vld [vmem:[#allocation8 + $0x48] sm:$0xff]
        %v661 = vld [vmem:[#allocation8 + $0x50] sm:$0xff]
        %v662 = vld [vmem:[#allocation8 + $0x58] sm:$0xff]
        %v663 = vld [vmem:[#allocation8 + $0x60] sm:$0xff]
        %v664 = vld [vmem:[#allocation8 + $0x68] sm:$0xff]
        %v665 = vld [vmem:[#allocation8 + $0x70] sm:$0xff]
        %v666 = vld [vmem:[#allocation8 + $0x78] sm:$0xff]
        %v667 = vld [vmem:[#allocation8 + $0x80] sm:$0xff]
        %v668 = vld [vmem:[#allocation8 + $0x88] sm:$0xff]
        %v669 = vld [vmem:[#allocation8 + $0x90] sm:$0xff]
        %v670 = vld [vmem:[#allocation8 + $0x98] sm:$0xff]
        %v671 = vld [vmem:[#allocation8 + $0xa0] sm:$0xff]
        %v672 = vld [vmem:[#allocation8 + $0xa8] sm:$0xff]
        %v673 = vld [vmem:[#allocation8 + $0xb0] sm:$0xff]
        %v674 = vld [vmem:[#allocation8 + $0xb8] sm:$0xff]
        %v675 = vld [vmem:[#allocation8 + $0xc0] sm:$0xff]
        %v676 = vld [vmem:[#allocation8 + $0xc8] sm:$0xff]
        %v677 = vld [vmem:[#allocation8 + $0xd0] sm:$0xff]
        %v678 = vld [vmem:[#allocation8 + $0xd8] sm:$0xff]
        %v679 = vld [vmem:[#allocation8 + $0xe0] sm:$0xff]
        %v680 = vld [vmem:[#allocation8 + $0xe8] sm:$0xff]
        %v681 = vld [vmem:[#allocation8 + $0xf0] sm:$0xff]
        %v682 = vld [vmem:[#allocation8 + $0xf8] sm:$0xff]
        %v683 = vld [vmem:[#allocation8 + $0x100] sm:$0xff]
        %v684 = vld [vmem:[#allocation8 + $0x108] sm:$0xff]
        %v685 = vld [vmem:[#allocation8 + $0x110] sm:$0xff]
        %v686 = vld [vmem:[#allocation8 + $0x118] sm:$0xff]
        %v687 = vld [vmem:[#allocation8 + $0x120] sm:$0xff]
        %v688 = vld [vmem:[#allocation8 + $0x128] sm:$0xff]
        %v689 = vld [vmem:[#allocation8 + $0x130] sm:$0xff]
        %v690 = vld [vmem:[#allocation8 + $0x138] sm:$0xff]
        %v691 = vld [vmem:[#allocation8 + $0x140] sm:$0xff]
        %v692 = vld [vmem:[#allocation8 + $0x148] sm:$0xff]
        %v693 = vld [vmem:[#allocation8 + $0x150] sm:$0xff]
        %v694 = vld [vmem:[#allocation8 + $0x158] sm:$0xff]
        %v695 = vld [vmem:[#allocation8 + $0x160] sm:$0xff]
        %v696 = vld [vmem:[#allocation8 + $0x168] sm:$0xff]
        %v697 = vld [vmem:[#allocation8 + $0x170] sm:$0xff]
        %v698 = vld [vmem:[#allocation8 + $0x178] sm:$0xff]
        %v699 = vld [vmem:[#allocation8 + $0x180] sm:$0xff]
        %v700 = vld [vmem:[#allocation8 + $0x188] sm:$0xff]
        %v701 = vld [vmem:[#allocation8 + $0x190] sm:$0xff]
        %v702 = vld [vmem:[#allocation8 + $0x198] sm:$0xff]
        %v703 = vld [vmem:[#allocation8 + $0x1a0] sm:$0xff]
        %v704 = vld [vmem:[#allocation8 + $0x1a8] sm:$0xff]
        %v705 = vld [vmem:[#allocation8 + $0x1b0] sm:$0xff]
        %v706 = vld [vmem:[#allocation8 + $0x1b8] sm:$0xff]
        %v707 = vld [vmem:[#allocation8 + $0x1c0] sm:$0xff]
        %v708 = vld [vmem:[#allocation8 + $0x1c8] sm:$0xff]
        %v709 = vld [vmem:[#allocation8 + $0x1d0] sm:$0xff]
        %v710 = vld [vmem:[#allocation8 + $0x1d8] sm:$0xff]
        %v711 = vld [vmem:[#allocation8 + $0x1e0] sm:$0xff]
        %v712 = vld [vmem:[#allocation8 + $0x1e8] sm:$0xff]
        %v713 = vld [vmem:[#allocation8 + $0x1f0] sm:$0xff]
        %v714 = vld [vmem:[#allocation8 + $0x1f8] sm:$0xff]
        %v715 = vld [vmem:[%s4] sm:$0x3]
        %v717 = vlaneseq
        %v718 = vshrl.u32 %v717, 7
        %v719 = vsub.s32 0, %v718
        %v720 = vrot.slane %v715, %v719
        %v721 = vlaneseq
        %v722 = vshrl.u32 %v721, 7
        %v723 = vsub.s32 1, %v722
        %v724 = vrot.slane %v715, %v723
        %727 = vmatprep.subr.mxu0 %v652
        %728 = vmatpush1.msra.mxu0 %v651
        %729 = vmatprep.subr.mxu0 %v654
        %730 = vmatpush1.msra.mxu0 %v653
        %731 = vmatprep.subr.mxu0 %v656
        %732 = vmatpush1.msra.mxu0 %v655
        %733 = vmatprep.subr.mxu0 %v658
        %734 = vmatpush1.msra.mxu0 %v657
        %735 = vmatprep.subr.mxu0 %v660
        %736 = vmatpush1.msra.mxu0 %v659
        %737 = vmatprep.subr.mxu0 %v662
        %738 = vmatpush1.msra.mxu0 %v661
        %739 = vmatprep.subr.mxu0 %v664
        %740 = vmatpush1.msra.mxu0 %v663
        %741 = vmatprep.subr.mxu0 %v666
        %742 = vmatpush1.msra.mxu0 %v665
        %743 = vmatprep.subr.mxu0 %v668
        %744 = vmatpush1.msra.mxu0 %v667
        %745 = vmatprep.subr.mxu0 %v670
        %746 = vmatpush1.msra.mxu0 %v669
        %747 = vmatprep.subr.mxu0 %v672
        %748 = vmatpush1.msra.mxu0 %v671
        %749 = vmatprep.subr.mxu0 %v674
        %750 = vmatpush1.msra.mxu0 %v673
        %751 = vmatprep.subr.mxu0 %v676
        %752 = vmatpush1.msra.mxu0 %v675
        %753 = vmatprep.subr.mxu0 %v678
        %754 = vmatpush1.msra.mxu0 %v677
        %755 = vmatprep.subr.mxu0 %v680
        %756 = vmatpush1.msra.mxu0 %v679
        %757 = vmatprep.subr.mxu0 %v682
        %758 = vmatpush1.msra.mxu0 %v681
        %759 = vmatprep.subr.mxu0 %v684
        %760 = vmatpush1.msra.mxu0 %v683
        %761 = vmatprep.subr.mxu0 %v686
        %762 = vmatpush1.msra.mxu0 %v685
        %763 = vmatprep.subr.mxu0 %v688
        %764 = vmatpush1.msra.mxu0 %v687
        %765 = vmatprep.subr.mxu0 %v690
        %766 = vmatpush1.msra.mxu0 %v689
        %767 = vmatprep.subr.mxu0 %v692
        %768 = vmatpush1.msra.mxu0 %v691
        %769 = vmatprep.subr.mxu0 %v694
        %770 = vmatpush1.msra.mxu0 %v693
        %771 = vmatprep.subr.mxu0 %v696
        %772 = vmatpush1.msra.mxu0 %v695
        %773 = vmatprep.subr.mxu0 %v698
        %774 = vmatpush1.msra.mxu0 %v697
        %775 = vmatprep.subr.mxu0 %v700
        %776 = vmatpush1.msra.mxu0 %v699
        %777 = vmatprep.subr.mxu0 %v702
        %778 = vmatpush1.msra.mxu0 %v701
        %779 = vmatprep.subr.mxu0 %v704
        %780 = vmatpush1.msra.mxu0 %v703
        %781 = vmatprep.subr.mxu0 %v706
        %782 = vmatpush1.msra.mxu0 %v705
        %783 = vmatprep.subr.mxu0 %v708
        %784 = vmatpush1.msra.mxu0 %v707
        %785 = vmatprep.subr.mxu0 %v710
        %786 = vmatpush1.msra.mxu0 %v709
        %787 = vmatprep.subr.mxu0 %v712
        %788 = vmatpush1.msra.mxu0 %v711
        %789 = vmatprep.subr.mxu0 %v714
        %790 = vmatpush1.msra.mxu0 %v713
        %791 = vmatprep.mubr.f32.mxu0 %v634
        %792 = vmatmul.mubr.f32.gmra.mrb[0].mxu0 %v633
        %v793 = vpop.f32.mrb[0].mxu0
        %v794 = vadd.f32 %v720, %v793
        %v795 = vpop.f32.mrb[0].mxu0
        %v796 = vadd.f32 %v724, %v795
        %797 = vmatprep.mubr.f32.mxu0 %v636
        %798 = vmatmul.mubr.f32.gmra.mrb[0].mxu0 %v635
        %v799 = vpop.f32.mrb[0].mxu0
        %v800 = vadd.f32 %v720, %v799
        %v801 = vpop.f32.mrb[0].mxu0
        %v802 = vadd.f32 %v724, %v801
        %803 = vmatprep.mubr.f32.mxu0 %v638
        %804 = vmatmul.mubr.f32.gmra.mrb[0].mxu0 %v637
        %v805 = vpop.f32.mrb[0].mxu0
        %v806 = vadd.f32 %v720, %v805
        %v807 = vpop.f32.mrb[0].mxu0
        %v808 = vadd.f32 %v724, %v807
        %809 = vmatprep.mubr.f32.mxu0 %v640
        %810 = vmatmul.mubr.f32.gmra.mrb[0].mxu0 %v639
        %v811 = vpop.f32.mrb[0].mxu0
        %v812 = vadd.f32 %v720, %v811
        %v813 = vpop.f32.mrb[0].mxu0
        %v814 = vadd.f32 %v724, %v813
        %815 = vmatprep.mubr.f32.mxu0 %v642
        %816 = vmatmul.mubr.f32.gmra.mrb[0].mxu0 %v641
        %v817 = vpop.f32.mrb[0].mxu0
        %v818 = vadd.f32 %v720, %v817
        %v819 = vpop.f32.mrb[0].mxu0
        %v820 = vadd.f32 %v724, %v819
        %821 = vmatprep.mubr.f32.mxu0 %v644
        %822 = vmatmul.mubr.f32.gmra.mrb[0].mxu0 %v643
        %v823 = vpop.f32.mrb[0].mxu0
        %v824 = vadd.f32 %v720, %v823
        %v825 = vpop.f32.mrb[0].mxu0
        %v826 = vadd.f32 %v724, %v825
        %827 = vmatprep.mubr.f32.mxu0 %v646
        %828 = vmatmul.mubr.f32.gmra.mrb[0].mxu0 %v645
        %v829 = vpop.f32.mrb[0].mxu0
        %v830 = vadd.f32 %v720, %v829
        %v831 = vpop.f32.mrb[0].mxu0
        %v832 = vadd.f32 %v724, %v831
        %833 = vmatprep.mubr.f32.mxu0 %v648
        %834 = vmatmul.mubr.f32.gmra.mrb[0].mxu0 %v647
        %v835 = vpop.f32.mrb[0].mxu0
        %v836 = vadd.f32 %v720, %v835
        %v837 = vpop.f32.mrb[0].mxu0
        %v838 = vadd.f32 %v724, %v837
        %839 = vmatprep.mubr.f32.mxu0 %v650
        %840 = vmatmul.mubr.f32.gmra.mrb[0].mxu0 %v649
        %v841 = vpop.f32.mrb[0].mxu0
        %v842 = vadd.f32 %v720, %v841
        %v843 = vpop.f32.mrb[0].mxu0
        %v844 = vadd.f32 %v724, %v843
        %845 = vdwg.mxu0
        %v846 = vrsqrt.pop %v794
        %v847 = vrsqrt.pop %v796
        %v848 = vrsqrt.pop %v800
        %v849 = vrsqrt.pop %v802
        %v850 = vrsqrt.pop %v806
        %v851 = vrsqrt.pop %v808
        %v852 = vrsqrt.pop %v812
        %v853 = vrsqrt.pop %v814
        %v854 = vrsqrt.pop %v818
        %v855 = vrsqrt.pop %v820
        %v856 = vrsqrt.pop %v824
        %v857 = vrsqrt.pop %v826
        %v858 = vrsqrt.pop %v830
        %v859 = vrsqrt.pop %v832
        %v860 = vrsqrt.pop %v836
        %v861 = vrsqrt.pop %v838
        %v862 = vrsqrt.pop %v842
        %v863 = vrsqrt.pop %v844
        %v864 = vmul.f32 %v587, %v846
        %v865 = vmul.f32 %v589, %v847
        %v866 = vmul.f32 %v591, %v848
        %v867 = vmul.f32 %v593, %v849
        %v868 = vmul.f32 %v597, %v850
        %v869 = vmul.f32 %v599, %v851
        %v870 = vmul.f32 %v601, %v852
        %v871 = vmul.f32 %v603, %v853
        %v872 = vmul.f32 %v607, %v854
        %v873 = vmul.f32 %v609, %v855
        %v874 = vmul.f32 %v611, %v856
        %v875 = vmul.f32 %v613, %v857
        %v876 = vmul.f32 %v617, %v858
        %v877 = vmul.f32 %v619, %v859
        %v878 = vmul.f32 %v621, %v860
        %v879 = vmul.f32 %v623, %v861
        %v880 = vmul.f32 %v627, %v862
        %v881 = vmul.f32 %v629, %v863
        %882 = vst [vmem:[#allocation2] sm:$0xff] %v864
        %883 = vst [vmem:[#allocation2 + $0x8] sm:$0xff] %v865
        %884 = vst [vmem:[#allocation2 + $0x10] sm:$0xff] %v866
        %885 = vst [vmem:[#allocation2 + $0x18] sm:$0xff] %v867
        %886 = vst [vmem:[#allocation2 + $0x20] sm:$0xff] %v868
        %887 = vst [vmem:[#allocation2 + $0x28] sm:$0xff] %v869
        %888 = vst [vmem:[#allocation2 + $0x30] sm:$0xff] %v870
        %889 = vst [vmem:[#allocation2 + $0x38] sm:$0xff] %v871
        %890 = vst [vmem:[#allocation2 + $0x40] sm:$0xff] %v872
        %891 = vst [vmem:[#allocation2 + $0x48] sm:$0xff] %v873
        %892 = vst [vmem:[#allocation2 + $0x50] sm:$0xff] %v874
        %893 = vst [vmem:[#allocation2 + $0x58] sm:$0xff] %v875
        %894 = vst [vmem:[#allocation2 + $0x60] sm:$0xff] %v876
        %895 = vst [vmem:[#allocation2 + $0x68] sm:$0xff] %v877
        %896 = vst [vmem:[#allocation2 + $0x70] sm:$0xff] %v878
        %897 = vst [vmem:[#allocation2 + $0x78] sm:$0xff] %v879
        %898 = vst [vmem:[#allocation2 + $0x80] sm:$0xff] %v880
        %899 = vst [vmem:[#allocation2 + $0x88] sm:$0xff] %v881
        %v900 = vld [vmem:[#allocation2] sm:$0xff]
        %v901 = vld [vmem:[#allocation2 + $0x8] sm:$0xff]
        %v902 = vld [vmem:[#allocation2 + $0x10] sm:$0xff]
        %v903 = vld [vmem:[#allocation2 + $0x18] sm:$0xff]
        %v904 = vld [vmem:[#allocation2 + $0x20] sm:$0xff]
        %v905 = vld [vmem:[#allocation2 + $0x28] sm:$0xff]
        %v906 = vld [vmem:[#allocation2 + $0x30] sm:$0xff]
        %v907 = vld [vmem:[#allocation2 + $0x38] sm:$0xff]
        %v908 = vld [vmem:[#allocation2 + $0x40] sm:$0xf]
        %v909 = vld [vmem:[#allocation2 + $0x48] sm:$0xf]
        %v910 = vmax.f32 %v900, %v904
        %v911 = vmax.f32 %v902, %v906
        %vm912 = vcmask 1043456
        %v913 = vsel %vm912, %v908, -inf
        %v914 = vmax.f32 %v910, %v913
        %v915 = vmax.f32 %v914, %v911
        %v916 = vrot.slane %v915, 4
        %v917 = vmax.f32 %v915, %v916
        %v918 = vrot.slane %v917, 2
        %v919 = vmax.f32 %v917, %v918
        %v920 = vrot.slane %v919, 1
        %v921 = vmax.f32 %v919, %v920
        %v922 = vmax.f32 %v901, %v905
        %v923 = vmax.f32 %v903, %v907
        %v924 = vsel %vm912, %v909, -inf
        %v925 = vmax.f32 %v922, %v924
        %v926 = vmax.f32 %v925, %v923
        %v927 = vrot.slane %v926, 4
        %v928 = vmax.f32 %v926, %v927
        %v929 = vrot.slane %v928, 2
        %v930 = vmax.f32 %v928, %v929
        %v931 = vrot.slane %v930, 1
        %v932 = vmax.f32 %v930, %v931
        %v933 = vld [vmem:[#allocation2 + $0x40] sm:$0xf0]
        %v934 = vld [vmem:[#allocation2 + $0x48] sm:$0xf0]
        %v935 = vld [vmem:[#allocation2 + $0x50] sm:$0xff]
        %v936 = vld [vmem:[#allocation2 + $0x58] sm:$0xff]
        %v937 = vld [vmem:[#allocation2 + $0x60] sm:$0xff]
        %v938 = vld [vmem:[#allocation2 + $0x68] sm:$0xff]
        %v939 = vld [vmem:[#allocation2 + $0x70] sm:$0xff]
        %v940 = vld [vmem:[#allocation2 + $0x78] sm:$0xff]
        %v941 = vld [vmem:[#allocation2 + $0x80] sm:$0xff]
        %v942 = vld [vmem:[#allocation2 + $0x88] sm:$0xff]
        %vm943 = vcmask 1047556
        %v944 = vsel %vm943, %v933, -inf
        %v945 = vmax.f32 %v944, %v937
        %v946 = vmax.f32 %v935, %v939
        %v947 = vmax.f32 %v945, %v941
        %v948 = vmax.f32 %v947, %v946
        %v949 = vrot.slane %v948, 4
        %v950 = vmax.f32 %v948, %v949
        %v951 = vrot.slane %v950, 2
        %v952 = vmax.f32 %v950, %v951
        %v953 = vrot.slane %v952, 1
        %v954 = vmax.f32 %v952, %v953
        %v955 = vsel %vm943, %v934, -inf
        %v956 = vmax.f32 %v955, %v938
        %v957 = vmax.f32 %v936, %v940
        %v958 = vmax.f32 %v956, %v942
        %v959 = vmax.f32 %v958, %v957
        %v960 = vrot.slane %v959, 4
        %v961 = vmax.f32 %v959, %v960
        %v962 = vrot.slane %v961, 2
        %v963 = vmax.f32 %v961, %v962
        %v964 = vrot.slane %v963, 1
        %v965 = vmax.f32 %v963, %v964
        %vm966 = vcmask 1040384
        %v967 = vsel %vm966, %v921, %v954
        %v968 = vsel %vm966, %v932, %v965
        %v971 = vcombine.low %v967, %v968
        %v973 = vunpack.c.l.s4 1983009808
        %v974 = vunpack.c.0.s8 %v973
        %v975 = vlaneseq
        %v976 = vshrl.u32 %v975, 7
        %v977 = vsub.s32 %v974, %v976
        %v978 = vrot.slane %v971, %v977
        %980 = vst [vmem:[%s290] sm:$0xf] %v978
        %s981 = sand.u32 %s157, 1
        %s982 = scalar_lea.sflag [#allocation5], %s981
        %s983 = sand.u32 %s157, 1
        %s984 = smul.addr %s983, 4
        %s985 = scalar_lea.vmem [#allocation9], %s984
        // Predicated region
        $region53: #{tpu_custom_call.1} parent=39 // pred_check
          %p986 = pneg %p167
        $region54: #{tpu_custom_call.1} parent=39 // pred_check_branch
          %988 = sbr.rel (%p986) target = $region56
        $region55: #{tpu_custom_call.1} parent=39 // pred_region
          %s990 = ssub.s32 64, 64
          %991 = vsyncadd %s982, %s990
          %s992 = smul.addr %s28, 2
          %s993 = smul.addr %s27, 4
          %s994 = sadd.s32 %s992, %s993
          %s995 = smul.addr %s994, 32
          %s996 = scalar_lea.hbm %s5, %s995
          %s998 = sshll.u32 %s985, 4
          %s999 = int_to_ptr.vmem [resolvable:$true] %s998
          %1001 = dma.vmem_to_hbm [thread:$0]  %s999, 64, %s996, %s982
        $region56: #{tpu_custom_call.1} parent=39 // pred_fallthru
          _
      $region40: #{tpu_custom_call.1} parent=5 // pred_fallthru
        _
      %p1002 = scmp.le.s32.totalorder 2, %s18
      // Predicated region
      $region57: #{tpu_custom_call.1} parent=5 // pred_check
        %p1003 = pneg %p1002
      $region58: #{tpu_custom_call.1} parent=5 // pred_check_branch
        %1005 = sbr.rel (%p1003) target = $region60
      $region59: #{tpu_custom_call.1} parent=5 // pred_region
        %s1006 = ssub.s32 %s18, 2
        // Predicated region
        $region61: #{tpu_custom_call.1} parent=59 // pred_check
          %p1007 = pneg %p173
        $region62: #{tpu_custom_call.1} parent=59 // pred_check_branch
          %1009 = sbr.rel (%p1007) target = $region64
        $region63: #{tpu_custom_call.1} parent=59 // pred_region
          %s1010 = sand.u32 %s158, 1
          %s1011 = scalar_lea.sflag [#allocation5], %s1010
          %s1012 = sand.u32 %s158, 1
          %s1013 = smul.addr %s1012, 4
          %s1014 = scalar_lea.vmem [#allocation9], %s1013
          %1015 = dma.done %s1011, 64
        $region64: #{tpu_custom_call.1} parent=59 // pred_fallthru
          _
      $region60: #{tpu_custom_call.1} parent=5 // pred_fallthru
        _
    $region6: #{tpu_custom_call.1} parent=1 // loop_footer
      %s22 = sadd.s32 1, %s18
    $region7: #{tpu_custom_call.1} parent=1 // loop_footer_branch
      %17 = sbr.rel target = $region3
    $region8: #{tpu_custom_call.1} parent=1 // loop_exit
      _
    %1016 = vsyncpa [#allocation4], 1
    %s1017 = scalar_lea.sflag [#allocation4], 1
    %1018 = vsyncpa %s1017, 1
    %1019 = vsyncpa [#allocation7], 1
    %1020 = vsyncpa [#allocation5], 1
    %s1021 = scalar_lea.sflag [#allocation5], 1
    %1022 = vsyncpa %s1021, 1

</llo_original>
